<compile_context>
chip_gen: v5e
topology: v5e:2x2
jax: 0.10.0
libtpu: 0.0.40
codegen_flags: <defaults>
</compile_context>

<pallas_src>
import functools

import jax
import jax.numpy as jnp
from jax.experimental import pallas as pl
from jax.experimental.pallas import tpu as pltpu


def _round_up(x: int, m: int) -> int:
    return ((x + m - 1) // m) * m


def _vmem_budget_bytes() -> int:
    """Usable VMEM budget, derived per TPU generation (v5e/v6e: 128 MiB,
    v7x: 64 MiB physical); leave headroom for Mosaic internals."""
    try:
        cap = int(pltpu.get_tpu_info().vmem_capacity_bytes)
    except Exception:
        cap = 64 * 1024 * 1024  # conservative fallback (v7x physical VMEM)
    return (cap * 3) // 4


# ----------------------------------------------------------------------------
# Fused kernel: NCHW spatial mean (VPU) -> (TN, K) @ (K, TD) MXU matmul + bias
# ----------------------------------------------------------------------------
def _encoder_kernel(x_ref, w_ref, b_ref, o_ref, pooled_ref, *, patch):
    # x_ref:      (TN, Cin, H, W)  f32   (full spatial extent per block)
    # w_ref:      (K, TD)          bf16  (K = Cin * patch * patch)
    # b_ref:      (1, TD)          f32
    # o_ref:      (TN, TD)         f32
    # pooled_ref: (TN, K)          f32 VMEM scratch (pooled patches, flattened)
    tn, cin, h, w = x_ref.shape
    hp_n, wp_n = h // patch, w // patch
    inv_p = 1.0 / float(hp_n * wp_n)

    x = x_ref[...]  # single load of the whole VMEM block

    # --- fused spatial mean over the (Hp, Wp) patch grid (VPU adds) ---------
    acc_h = None
    for hp in range(hp_n):                       # sublane-aligned H slices
        s = x[:, :, hp * patch:(hp + 1) * patch, :]
        acc_h = s if acc_h is None else acc_h + s      # (TN, Cin, patch, W)
    acc = None
    for wp in range(wp_n):                       # lane slices along W
        s = acc_h[:, :, :, wp * patch:(wp + 1) * patch]
        acc = s if acc is None else acc + s            # (TN, Cin, patch, patch)
    acc = acc * inv_p

    # --- flatten to (TN, K) in (Cin, ph, pw) order via scratch stores --------
    for c in range(cin):
        for ph in range(patch):
            off = (c * patch + ph) * patch
            pooled_ref[:, pl.ds(off, patch)] = acc[:, c, ph, :]

    # --- MXU matmul: bf16 operands, f32 accumulation, bias add --------------
    pooled = pooled_ref[...].astype(jnp.bfloat16)
    o_ref[...] = (
        jnp.dot(pooled, w_ref[...], preferred_element_type=jnp.float32)
        + b_ref[...]
    )


# ----------------------------------------------------------------------------
# Host-side wrappers
# ----------------------------------------------------------------------------
def prepare_backbone_params(w, b):
    """One-time weight prep (outside the per-call hot path): pad D up to a
    multiple of 128 lanes and cast the matmul weight to bf16."""
    k, d = w.shape
    dp = _round_up(d, 128)
    w_p = jnp.pad(w, ((0, 0), (0, dp - d))).astype(jnp.bfloat16)
    b_p = jnp.pad(b.reshape(1, d), ((0, 0), (0, dp - d))).astype(jnp.float32)
    return w_p, b_p


def encoder_forward(x, w_bf16, b_f32, patch, embed_dim):
    """x: (B, C, H, W) f32 NCHW; w_bf16: (K, Dp) bf16; b_f32: (1, Dp) f32."""
    B, C, H, W = x.shape
    assert C % 2 == 0 and H % patch == 0 and W % patch == 0

    # --- Encoder.forward reshape: (B, C, H, W) -> (2B, C//2, H, W) ----------
    x = x.reshape(2 * B, C // 2, H, W)
    N, Cin = 2 * B, C // 2
    K = Cin * patch * patch
    Kw, Dp = w_bf16.shape
    assert Kw == K and Dp % 128 == 0

    # --- Tile / VMEM derivation (per TPU generation) -------------------------
    budget = _vmem_budget_bytes()
    TN = min(128, _round_up(N, 8))
    TD = Dp if Dp <= 512 else 512
    while Dp % TD != 0:
        TD -= 128

    def _need(tn, td):  # double-buffered input/output blocks + flatten scratch
        return (2 * (tn * Cin * H * W * 4 + K * td * 2 + td * 4 + tn * td * 4)
                + tn * K * 4)

    while TD > 128 and _need(TN, TD) > budget:
        TD = max(128, TD // 2)
        while Dp % TD != 0:
            TD -= 128
    while TN > 8 and _need(TN, TD) > budget:
        TN = max(8, _round_up(TN // 2, 8))

    Np = _round_up(N, TN)

    # v7x has 2 TensorCores: try to expose >= 2 parallel grid steps.
    if (Np // TN) * (Dp // TD) < 2 and TD > 128 and Dp % (TD // 2) == 0:
        TD //= 2

    if Np != N:  # zero-pad a handful of batch rows (exact no-op for the matmul)
        x = jnp.pad(x, ((0, Np - N), (0, 0), (0, 0), (0, 0)))

    grid = (Np // TN, Dp // TD)
    n_i, n_j = grid

    cost = pl.CostEstimate(
        flops=2 * Np * K * Dp + Np * Cin * H * W,      # MXU MACs + VPU pooling adds
        transcendentals=0,
        bytes_accessed=(Np * Cin * H * W * 4           # x read once (block idx const over j)
                        + n_i * (K * Dp * 2 + Dp * 4)  # w/b re-read per N tile
                        + Np * Dp * 4),                # output write
    )

    out = pl.pallas_call(
        functools.partial(_encoder_kernel, patch=patch),
        out_shape=jax.ShapeDtypeStruct((Np, Dp), jnp.float32),
        grid=grid,
        in_specs=[
            pl.BlockSpec((TN, Cin, H, W), lambda i, j: (i, 0, 0, 0)),
            pl.BlockSpec((K, TD), lambda i, j: (0, j)),
            pl.BlockSpec((1, TD), lambda i, j: (0, j)),
        ],
        out_specs=pl.BlockSpec((TN, TD), lambda i, j: (i, j)),
        scratch_shapes=[pltpu.VMEM((TN, K), jnp.float32)],
        compiler_params=pltpu.CompilerParams(
            dimension_semantics=("parallel", "parallel"),
            vmem_limit_bytes=budget,
        ),
        cost_estimate=cost,
    )(x, w_bf16, b_f32)

    if Np != N or Dp != embed_dim:
        out = out[:N, :embed_dim]
    return out


# ----------------------------------------------------------------------------
# Reference (plain JAX f32, un-pooled formulation) for sanity checking
# ----------------------------------------------------------------------------
def encoder_reference(x, w_patch, b_patch, patch):
    B, C, H, W = x.shape
    x = x.reshape(2 * B, C // 2, H, W)
    N, Cin = 2 * B, C // 2
    Hp, Wp = H // patch, W // patch
    xp = x.reshape(N, Cin, Hp, patch, Wp, patch)
    xp = jnp.transpose(xp, (0, 2, 4, 1, 3, 5)).reshape(N, Hp * Wp, -1)
    y = jnp.einsum("npk,kd->npd", xp, w_patch) + b_patch[None, :, :]
    return jnp.mean(y, axis=1)


if __name__ == "__main__":
    # Small deterministic shapes consistent with the module's forward:
    # x: (B=2, C=4, H=16, W=16); C must be even (reshape to C//2 channels).
    B, C, H, W = 2, 4, 16, 16
    patch = 8
    embed_dim = 32
    K = (C // 2) * patch * patch

    key = jax.random.PRNGKey(0)
    kx, kw, kb = jax.random.split(key, 3)
    x = jax.random.normal(kx, (B, C, H, W), dtype=jnp.float32)
    w_patch = (jax.random.normal(kw, (K, embed_dim), dtype=jnp.float32)
               * (1.0 / jnp.sqrt(K)))
    b_patch = jax.random.normal(kb, (1, embed_dim), dtype=jnp.float32) * 0.01

    # One-time weight prep (pad + bf16 cast), hoisted out of the hot path.
    w_prep, b_prep = prepare_backbone_params(w_patch, b_patch)

    fwd = jax.jit(encoder_forward, static_argnums=(3, 4))
    out = fwd(x, w_prep, b_prep, patch, embed_dim)
    out = jax.block_until_ready(out)

    ref = encoder_reference(x, w_patch, b_patch, patch)
    assert out.shape == (2 * B, embed_dim), out.shape
    # bf16 MXU operands with f32 accumulation -> loosened tolerance vs f32 ref.
    assert jnp.allclose(out, ref, atol=3e-2, rtol=3e-2), "mismatch vs reference"

    print("KERNEL_OK")
</pallas_src>

<mosaic_0001>
module attributes {stable_mosaic.version = 11 : i64} {
  func.func @_encoder_kernel(%arg0: i32, %arg1: i32, %arg2: memref<8x2x16x16xf32, #tpu.memory_space<vmem>>, %arg3: memref<128x128xbf16, #tpu.memory_space<vmem>>, %arg4: memref<1x128xf32, #tpu.memory_space<vmem>>, %arg5: memref<8x128xf32, #tpu.memory_space<vmem>>, %arg6: memref<8x128xf32, #tpu.memory_space<vmem>>) attributes {dimension_semantics = [#tpu.dimension_semantics<parallel>, #tpu.dimension_semantics<parallel>], iteration_bounds = array<i64: 1, 1>, scalar_prefetch = 0 : i64, scratch_operands = 1 : i64, tpu.core_type = #tpu.core_type<tc>, window_params = [{transform_indices = @transform_0, window_bounds = array<i64: 8, 2, 16, 16>}, {transform_indices = @transform_1, window_bounds = array<i64: 128, 128>}, {transform_indices = @transform_2, window_bounds = array<i64: 1, 128>}, {transform_indices = @transform_3, window_bounds = array<i64: 8, 128>}]} {
    %c0 = arith.constant 0 : index
    %c0_0 = arith.constant 0 : index
    %c0_1 = arith.constant 0 : index
    %c0_2 = arith.constant 0 : index
    %0 = vector.load %arg2[%c0, %c0_0, %c0_1, %c0_2] : memref<8x2x16x16xf32, #tpu.memory_space<vmem>>, vector<8x2x16x16xf32>
    %1 = vector.extract_strided_slice %0 {offsets = [0, 0, 0, 0], sizes = [8, 2, 8, 16], strides = [1, 1, 1, 1]} : vector<8x2x16x16xf32> to vector<8x2x8x16xf32>
    %2 = vector.extract_strided_slice %0 {offsets = [0, 0, 8, 0], sizes = [8, 2, 8, 16], strides = [1, 1, 1, 1]} : vector<8x2x16x16xf32> to vector<8x2x8x16xf32>
    %3 = arith.addf %1, %2 : vector<8x2x8x16xf32>
    %4 = vector.extract_strided_slice %3 {offsets = [0, 0, 0, 0], sizes = [8, 2, 8, 8], strides = [1, 1, 1, 1]} : vector<8x2x8x16xf32> to vector<8x2x8x8xf32>
    %5 = vector.extract_strided_slice %3 {offsets = [0, 0, 0, 8], sizes = [8, 2, 8, 8], strides = [1, 1, 1, 1]} : vector<8x2x8x16xf32> to vector<8x2x8x8xf32>
    %6 = arith.addf %4, %5 : vector<8x2x8x8xf32>
    %cst = arith.constant 2.500000e-01 : f32
    %7 = vector.broadcast %cst : f32 to vector<8x2x8x8xf32>
    %8 = arith.mulf %6, %7 : vector<8x2x8x8xf32>
    %9 = vector.extract_strided_slice %8 {offsets = [0, 0, 0, 0], sizes = [8, 1, 1, 8], strides = [1, 1, 1, 1]} : vector<8x2x8x8xf32> to vector<8x1x1x8xf32>
    %10 = vector.shape_cast %9 : vector<8x1x1x8xf32> to vector<8x8xf32>
    %c0_3 = arith.constant 0 : index
    %c0_4 = arith.constant 0 : index
    %11 = vector.load %arg6[%c0_3, %c0_4] : memref<8x128xf32, #tpu.memory_space<vmem>>, vector<8x8xf32>
    tpu.vector_store %arg6[%c0_3, %c0_4], %10 {strides = array<i32>} : memref<8x128xf32, #tpu.memory_space<vmem>>, vector<8x8xf32>,
    %12 = vector.extract_strided_slice %8 {offsets = [0, 0, 1, 0], sizes = [8, 1, 1, 8], strides = [1, 1, 1, 1]} : vector<8x2x8x8xf32> to vector<8x1x1x8xf32>
    %13 = vector.shape_cast %12 : vector<8x1x1x8xf32> to vector<8x8xf32>
    %c0_5 = arith.constant 0 : index
    %c8 = arith.constant 8 : index
    %14 = vector.load %arg6[%c0_5, %c8] : memref<8x128xf32, #tpu.memory_space<vmem>>, vector<8x8xf32>
    tpu.vector_store %arg6[%c0_5, %c8], %13 {strides = array<i32>} : memref<8x128xf32, #tpu.memory_space<vmem>>, vector<8x8xf32>,
    %15 = vector.extract_strided_slice %8 {offsets = [0, 0, 2, 0], sizes = [8, 1, 1, 8], strides = [1, 1, 1, 1]} : vector<8x2x8x8xf32> to vector<8x1x1x8xf32>
    %16 = vector.shape_cast %15 : vector<8x1x1x8xf32> to vector<8x8xf32>
    %c0_6 = arith.constant 0 : index
    %c16 = arith.constant 16 : index
    %17 = vector.load %arg6[%c0_6, %c16] : memref<8x128xf32, #tpu.memory_space<vmem>>, vector<8x8xf32>
    tpu.vector_store %arg6[%c0_6, %c16], %16 {strides = array<i32>} : memref<8x128xf32, #tpu.memory_space<vmem>>, vector<8x8xf32>,
    %18 = vector.extract_strided_slice %8 {offsets = [0, 0, 3, 0], sizes = [8, 1, 1, 8], strides = [1, 1, 1, 1]} : vector<8x2x8x8xf32> to vector<8x1x1x8xf32>
    %19 = vector.shape_cast %18 : vector<8x1x1x8xf32> to vector<8x8xf32>
    %c0_7 = arith.constant 0 : index
    %c24 = arith.constant 24 : index
    %20 = vector.load %arg6[%c0_7, %c24] : memref<8x128xf32, #tpu.memory_space<vmem>>, vector<8x8xf32>
    tpu.vector_store %arg6[%c0_7, %c24], %19 {strides = array<i32>} : memref<8x128xf32, #tpu.memory_space<vmem>>, vector<8x8xf32>,
    %21 = vector.extract_strided_slice %8 {offsets = [0, 0, 4, 0], sizes = [8, 1, 1, 8], strides = [1, 1, 1, 1]} : vector<8x2x8x8xf32> to vector<8x1x1x8xf32>
    %22 = vector.shape_cast %21 : vector<8x1x1x8xf32> to vector<8x8xf32>
    %c0_8 = arith.constant 0 : index
    %c32 = arith.constant 32 : index
    %23 = vector.load %arg6[%c0_8, %c32] : memref<8x128xf32, #tpu.memory_space<vmem>>, vector<8x8xf32>
    tpu.vector_store %arg6[%c0_8, %c32], %22 {strides = array<i32>} : memref<8x128xf32, #tpu.memory_space<vmem>>, vector<8x8xf32>,
    %24 = vector.extract_strided_slice %8 {offsets = [0, 0, 5, 0], sizes = [8, 1, 1, 8], strides = [1, 1, 1, 1]} : vector<8x2x8x8xf32> to vector<8x1x1x8xf32>
    %25 = vector.shape_cast %24 : vector<8x1x1x8xf32> to vector<8x8xf32>
    %c0_9 = arith.constant 0 : index
    %c40 = arith.constant 40 : index
    %26 = vector.load %arg6[%c0_9, %c40] : memref<8x128xf32, #tpu.memory_space<vmem>>, vector<8x8xf32>
    tpu.vector_store %arg6[%c0_9, %c40], %25 {strides = array<i32>} : memref<8x128xf32, #tpu.memory_space<vmem>>, vector<8x8xf32>,
    %27 = vector.extract_strided_slice %8 {offsets = [0, 0, 6, 0], sizes = [8, 1, 1, 8], strides = [1, 1, 1, 1]} : vector<8x2x8x8xf32> to vector<8x1x1x8xf32>
    %28 = vector.shape_cast %27 : vector<8x1x1x8xf32> to vector<8x8xf32>
    %c0_10 = arith.constant 0 : index
    %c48 = arith.constant 48 : index
    %29 = vector.load %arg6[%c0_10, %c48] : memref<8x128xf32, #tpu.memory_space<vmem>>, vector<8x8xf32>
    tpu.vector_store %arg6[%c0_10, %c48], %28 {strides = array<i32>} : memref<8x128xf32, #tpu.memory_space<vmem>>, vector<8x8xf32>,
    %30 = vector.extract_strided_slice %8 {offsets = [0, 0, 7, 0], sizes = [8, 1, 1, 8], strides = [1, 1, 1, 1]} : vector<8x2x8x8xf32> to vector<8x1x1x8xf32>
    %31 = vector.shape_cast %30 : vector<8x1x1x8xf32> to vector<8x8xf32>
    %c0_11 = arith.constant 0 : index
    %c56 = arith.constant 56 : index
    %32 = vector.load %arg6[%c0_11, %c56] : memref<8x128xf32, #tpu.memory_space<vmem>>, vector<8x8xf32>
    tpu.vector_store %arg6[%c0_11, %c56], %31 {strides = array<i32>} : memref<8x128xf32, #tpu.memory_space<vmem>>, vector<8x8xf32>,
    %33 = vector.extract_strided_slice %8 {offsets = [0, 1, 0, 0], sizes = [8, 1, 1, 8], strides = [1, 1, 1, 1]} : vector<8x2x8x8xf32> to vector<8x1x1x8xf32>
    %34 = vector.shape_cast %33 : vector<8x1x1x8xf32> to vector<8x8xf32>
    %c0_12 = arith.constant 0 : index
    %c64 = arith.constant 64 : index
    %35 = vector.load %arg6[%c0_12, %c64] : memref<8x128xf32, #tpu.memory_space<vmem>>, vector<8x8xf32>
    tpu.vector_store %arg6[%c0_12, %c64], %34 {strides = array<i32>} : memref<8x128xf32, #tpu.memory_space<vmem>>, vector<8x8xf32>,
    %36 = vector.extract_strided_slice %8 {offsets = [0, 1, 1, 0], sizes = [8, 1, 1, 8], strides = [1, 1, 1, 1]} : vector<8x2x8x8xf32> to vector<8x1x1x8xf32>
    %37 = vector.shape_cast %36 : vector<8x1x1x8xf32> to vector<8x8xf32>
    %c0_13 = arith.constant 0 : index
    %c72 = arith.constant 72 : index
    %38 = vector.load %arg6[%c0_13, %c72] : memref<8x128xf32, #tpu.memory_space<vmem>>, vector<8x8xf32>
    tpu.vector_store %arg6[%c0_13, %c72], %37 {strides = array<i32>} : memref<8x128xf32, #tpu.memory_space<vmem>>, vector<8x8xf32>,
    %39 = vector.extract_strided_slice %8 {offsets = [0, 1, 2, 0], sizes = [8, 1, 1, 8], strides = [1, 1, 1, 1]} : vector<8x2x8x8xf32> to vector<8x1x1x8xf32>
    %40 = vector.shape_cast %39 : vector<8x1x1x8xf32> to vector<8x8xf32>
    %c0_14 = arith.constant 0 : index
    %c80 = arith.constant 80 : index
    %41 = vector.load %arg6[%c0_14, %c80] : memref<8x128xf32, #tpu.memory_space<vmem>>, vector<8x8xf32>
    tpu.vector_store %arg6[%c0_14, %c80], %40 {strides = array<i32>} : memref<8x128xf32, #tpu.memory_space<vmem>>, vector<8x8xf32>,
    %42 = vector.extract_strided_slice %8 {offsets = [0, 1, 3, 0], sizes = [8, 1, 1, 8], strides = [1, 1, 1, 1]} : vector<8x2x8x8xf32> to vector<8x1x1x8xf32>
    %43 = vector.shape_cast %42 : vector<8x1x1x8xf32> to vector<8x8xf32>
    %c0_15 = arith.constant 0 : index
    %c88 = arith.constant 88 : index
    %44 = vector.load %arg6[%c0_15, %c88] : memref<8x128xf32, #tpu.memory_space<vmem>>, vector<8x8xf32>
    tpu.vector_store %arg6[%c0_15, %c88], %43 {strides = array<i32>} : memref<8x128xf32, #tpu.memory_space<vmem>>, vector<8x8xf32>,
    %45 = vector.extract_strided_slice %8 {offsets = [0, 1, 4, 0], sizes = [8, 1, 1, 8], strides = [1, 1, 1, 1]} : vector<8x2x8x8xf32> to vector<8x1x1x8xf32>
    %46 = vector.shape_cast %45 : vector<8x1x1x8xf32> to vector<8x8xf32>
    %c0_16 = arith.constant 0 : index
    %c96 = arith.constant 96 : index
    %47 = vector.load %arg6[%c0_16, %c96] : memref<8x128xf32, #tpu.memory_space<vmem>>, vector<8x8xf32>
    tpu.vector_store %arg6[%c0_16, %c96], %46 {strides = array<i32>} : memref<8x128xf32, #tpu.memory_space<vmem>>, vector<8x8xf32>,
    %48 = vector.extract_strided_slice %8 {offsets = [0, 1, 5, 0], sizes = [8, 1, 1, 8], strides = [1, 1, 1, 1]} : vector<8x2x8x8xf32> to vector<8x1x1x8xf32>
    %49 = vector.shape_cast %48 : vector<8x1x1x8xf32> to vector<8x8xf32>
    %c0_17 = arith.constant 0 : index
    %c104 = arith.constant 104 : index
    %50 = vector.load %arg6[%c0_17, %c104] : memref<8x128xf32, #tpu.memory_space<vmem>>, vector<8x8xf32>
    tpu.vector_store %arg6[%c0_17, %c104], %49 {strides = array<i32>} : memref<8x128xf32, #tpu.memory_space<vmem>>, vector<8x8xf32>,
    %51 = vector.extract_strided_slice %8 {offsets = [0, 1, 6, 0], sizes = [8, 1, 1, 8], strides = [1, 1, 1, 1]} : vector<8x2x8x8xf32> to vector<8x1x1x8xf32>
    %52 = vector.shape_cast %51 : vector<8x1x1x8xf32> to vector<8x8xf32>
    %c0_18 = arith.constant 0 : index
    %c112 = arith.constant 112 : index
    %53 = vector.load %arg6[%c0_18, %c112] : memref<8x128xf32, #tpu.memory_space<vmem>>, vector<8x8xf32>
    tpu.vector_store %arg6[%c0_18, %c112], %52 {strides = array<i32>} : memref<8x128xf32, #tpu.memory_space<vmem>>, vector<8x8xf32>,
    %54 = vector.extract_strided_slice %8 {offsets = [0, 1, 7, 0], sizes = [8, 1, 1, 8], strides = [1, 1, 1, 1]} : vector<8x2x8x8xf32> to vector<8x1x1x8xf32>
    %55 = vector.shape_cast %54 : vector<8x1x1x8xf32> to vector<8x8xf32>
    %c0_19 = arith.constant 0 : index
    %c120 = arith.constant 120 : index
    %56 = vector.load %arg6[%c0_19, %c120] : memref<8x128xf32, #tpu.memory_space<vmem>>, vector<8x8xf32>
    tpu.vector_store %arg6[%c0_19, %c120], %55 {strides = array<i32>} : memref<8x128xf32, #tpu.memory_space<vmem>>, vector<8x8xf32>,
    %c0_20 = arith.constant 0 : index
    %c0_21 = arith.constant 0 : index
    %57 = vector.load %arg6[%c0_20, %c0_21] : memref<8x128xf32, #tpu.memory_space<vmem>>, vector<8x128xf32>
    %58 = arith.truncf %57 : vector<8x128xf32> to vector<8x128xbf16>
    %c0_22 = arith.constant 0 : index
    %c0_23 = arith.constant 0 : index
    %59 = vector.load %arg3[%c0_22, %c0_23] : memref<128x128xbf16, #tpu.memory_space<vmem>>, vector<128x128xbf16>
    %cst_24 = arith.constant dense<0.000000e+00> : vector<8x128xf32>
    %60 = tpu.matmul %58, %59, %cst_24 {dimension_numbers = #tpu.dot_dimension_numbers<[1], [0], [0], [1], [0, 0, 1, 1], [], []>} : vector<8x128xbf16>, vector<128x128xbf16>, vector<8x128xf32> -> vector<8x128xf32>
    %c0_25 = arith.constant 0 : index
    %c0_26 = arith.constant 0 : index
    %61 = vector.load %arg4[%c0_25, %c0_26] : memref<1x128xf32, #tpu.memory_space<vmem>>, vector<1x128xf32>
    %62 = vector.broadcast %61 : vector<1x128xf32> to vector<8x128xf32>
    %63 = arith.addf %60, %62 : vector<8x128xf32>
    %c0_27 = arith.constant 0 : index
    %c0_28 = arith.constant 0 : index
    %64 = vector.load %arg5[%c0_27, %c0_28] : memref<8x128xf32, #tpu.memory_space<vmem>>, vector<8x128xf32>
    tpu.vector_store %arg5[%c0_27, %c0_28], %63 {strides = array<i32>} : memref<8x128xf32, #tpu.memory_space<vmem>>, vector<8x128xf32>,
    return
  }
  func.func @transform_0(%arg0: i32, %arg1: i32) -> (i32, i32, i32, i32) {
    %c0_i32 = arith.constant 0 : i32
    %c0_i32_0 = arith.constant 0 : i32
    %c0_i32_1 = arith.constant 0 : i32
    %c0_i32_2 = arith.constant 0 : i32
    return %arg0, %c0_i32, %c0_i32_0, %c0_i32_1 : i32, i32, i32, i32
  }
  func.func @transform_1(%arg0: i32, %arg1: i32) -> (i32, i32) {
    %c0_i32 = arith.constant 0 : i32
    %c0_i32_0 = arith.constant 0 : i32
    return %c0_i32, %arg1 : i32, i32
  }
  func.func @transform_2(%arg0: i32, %arg1: i32) -> (i32, i32) {
    %c0_i32 = arith.constant 0 : i32
    %c0_i32_0 = arith.constant 0 : i32
    return %c0_i32, %arg1 : i32, i32
  }
  func.func @transform_3(%arg0: i32, %arg1: i32) -> (i32, i32) {
    %c0_i32 = arith.constant 0 : i32
    return %arg0, %arg1 : i32, i32
  }
}

</mosaic_0001>

<llo_original>
// kernel: encoder_forward.1
$region0: #{encoder_forward.1}
  #allocation0 [shape = 'u32[]', space=smem, size = 0x4, offset = 0x4, fixed_abs, tag = 'smem constant byte address 0x4 - core index']
  #allocation1 [shape = 'u32[72,128]{1,0:T(1,128)}', space=vmem, size = 0x9000, scoped, tag = 'internal scratch']
  #allocation2 [shape = 'f32[8,128]{1,0:T(8,128)}', space=vmem, size = 0x1000, scoped, tag = 'scratch operand']
  %s0 = inlined_call_operand.vmem [shape: f32[8,2,16,16], index: 0, kind: input, shape index: {}]
  %s1 = inlined_call_operand.vmem [shape: bf16[128,128], index: 1, kind: input, shape index: {}]
  %s2 = inlined_call_operand.vmem [shape: f32[1,128], index: 2, kind: input, shape index: {}]
  %s3 = inlined_call_operand.vmem [shape: f32[8,128], index: 3, kind: output, shape index: {}]
  %s4 = sld [smem:[#allocation0]]
  $region22: #{encoder_forward.1} parent=0
    _
  %s6 = ssub.s32 1, %s4
  %s7 = scalar_select 0, %s6, %s4
  // Predicated region
  $region2: #{encoder_forward.1} parent=0 // pred_check
    _
  $region3: #{encoder_forward.1} parent=0 // pred_check_branch
    %9 = sbr.rel (0) target = $region5
  $region4: #{encoder_forward.1} parent=0 // pred_region
    _
  $region5: #{encoder_forward.1} parent=0 // pred_fallthru
    _
  // Predicated region
  $region6: #{encoder_forward.1} parent=0 // pred_check
    _
  $region7: #{encoder_forward.1} parent=0 // pred_check_branch
    %11 = sbr.rel (0) target = $region9
  $region8: #{encoder_forward.1} parent=0 // pred_region
    _
  $region9: #{encoder_forward.1} parent=0 // pred_fallthru
    _
  // Predicated region
  $region10: #{encoder_forward.1} parent=0 // pred_check
    _
  $region11: #{encoder_forward.1} parent=0 // pred_check_branch
    %13 = sbr.rel (0) target = $region13
  $region12: #{encoder_forward.1} parent=0 // pred_region
    _
  $region13: #{encoder_forward.1} parent=0 // pred_fallthru
    _
  %v14 = vld [vmem:[%s0] sm:$0xff]
  %v15 = vld [vmem:[%s0 + $0x8] sm:$0xff]
  %v16 = vld [vmem:[%s0 + $0x10] sm:$0xff]
  %v17 = vld [vmem:[%s0 + $0x18] sm:$0xff]
  %v18 = vld [vmem:[%s0 + $0x20] sm:$0xff]
  %v19 = vld [vmem:[%s0 + $0x28] sm:$0xff]
  %v20 = vld [vmem:[%s0 + $0x30] sm:$0xff]
  %v21 = vld [vmem:[%s0 + $0x38] sm:$0xff]
  %v22 = vld [vmem:[%s0 + $0x40] sm:$0xff]
  %v23 = vld [vmem:[%s0 + $0x48] sm:$0xff]
  %v24 = vld [vmem:[%s0 + $0x50] sm:$0xff]
  %v25 = vld [vmem:[%s0 + $0x58] sm:$0xff]
  %v26 = vld [vmem:[%s0 + $0x60] sm:$0xff]
  %v27 = vld [vmem:[%s0 + $0x68] sm:$0xff]
  %v28 = vld [vmem:[%s0 + $0x70] sm:$0xff]
  %v29 = vld [vmem:[%s0 + $0x78] sm:$0xff]
  %v30 = vld [vmem:[%s0 + $0x80] sm:$0xff]
  %v31 = vld [vmem:[%s0 + $0x88] sm:$0xff]
  %v32 = vld [vmem:[%s0 + $0x90] sm:$0xff]
  %v33 = vld [vmem:[%s0 + $0x98] sm:$0xff]
  %v34 = vld [vmem:[%s0 + $0xa0] sm:$0xff]
  %v35 = vld [vmem:[%s0 + $0xa8] sm:$0xff]
  %v36 = vld [vmem:[%s0 + $0xb0] sm:$0xff]
  %v37 = vld [vmem:[%s0 + $0xb8] sm:$0xff]
  %v38 = vld [vmem:[%s0 + $0xc0] sm:$0xff]
  %v39 = vld [vmem:[%s0 + $0xc8] sm:$0xff]
  %v40 = vld [vmem:[%s0 + $0xd0] sm:$0xff]
  %v41 = vld [vmem:[%s0 + $0xd8] sm:$0xff]
  %v42 = vld [vmem:[%s0 + $0xe0] sm:$0xff]
  %v43 = vld [vmem:[%s0 + $0xe8] sm:$0xff]
  %v44 = vld [vmem:[%s0 + $0xf0] sm:$0xff]
  %v45 = vld [vmem:[%s0 + $0xf8] sm:$0xff]
  %v46 = vadd.f32 %v14, %v15
  %v47 = vadd.f32 %v16, %v17
  %v48 = vadd.f32 %v18, %v19
  %v49 = vadd.f32 %v20, %v21
  %v50 = vadd.f32 %v22, %v23
  %v51 = vadd.f32 %v24, %v25
  %v52 = vadd.f32 %v26, %v27
  %v53 = vadd.f32 %v28, %v29
  %v54 = vadd.f32 %v30, %v31
  %v55 = vadd.f32 %v32, %v33
  %v56 = vadd.f32 %v34, %v35
  %v57 = vadd.f32 %v36, %v37
  %v58 = vadd.f32 %v38, %v39
  %v59 = vadd.f32 %v40, %v41
  %v60 = vadd.f32 %v42, %v43
  %v61 = vadd.f32 %v44, %v45
  %78 = vrot.lane.b32.xlu0 %v46, 120
  %v79 = vpop.permute.xlu0 %78
  %80 = vrot.lane.b32.xlu0 %v47, 120
  %v81 = vpop.permute.xlu0 %80
  %82 = vrot.lane.b32.xlu0 %v48, 120
  %v83 = vpop.permute.xlu0 %82
  %84 = vrot.lane.b32.xlu0 %v49, 120
  %v85 = vpop.permute.xlu0 %84
  %86 = vrot.lane.b32.xlu0 %v50, 120
  %v87 = vpop.permute.xlu0 %86
  %88 = vrot.lane.b32.xlu0 %v51, 120
  %v89 = vpop.permute.xlu0 %88
  %90 = vrot.lane.b32.xlu0 %v52, 120
  %v91 = vpop.permute.xlu0 %90
  %92 = vrot.lane.b32.xlu0 %v53, 120
  %v93 = vpop.permute.xlu0 %92
  %94 = vrot.lane.b32.xlu0 %v54, 120
  %v95 = vpop.permute.xlu0 %94
  %96 = vrot.lane.b32.xlu0 %v55, 120
  %v97 = vpop.permute.xlu0 %96
  %98 = vrot.lane.b32.xlu0 %v56, 120
  %v99 = vpop.permute.xlu0 %98
  %100 = vrot.lane.b32.xlu0 %v57, 120
  %v101 = vpop.permute.xlu0 %100
  %102 = vrot.lane.b32.xlu0 %v58, 120
  %v103 = vpop.permute.xlu0 %102
  %104 = vrot.lane.b32.xlu0 %v59, 120
  %v105 = vpop.permute.xlu0 %104
  %106 = vrot.lane.b32.xlu0 %v60, 120
  %v107 = vpop.permute.xlu0 %106
  %108 = vrot.lane.b32.xlu0 %v61, 120
  %v109 = vpop.permute.xlu0 %108
  %v126 = vadd.f32 %v46, %v79
  %v127 = vadd.f32 %v47, %v81
  %v128 = vadd.f32 %v48, %v83
  %v129 = vadd.f32 %v49, %v85
  %v130 = vadd.f32 %v50, %v87
  %v131 = vadd.f32 %v51, %v89
  %v132 = vadd.f32 %v52, %v91
  %v133 = vadd.f32 %v53, %v93
  %v134 = vadd.f32 %v54, %v95
  %v135 = vadd.f32 %v55, %v97
  %v136 = vadd.f32 %v56, %v99
  %v137 = vadd.f32 %v57, %v101
  %v138 = vadd.f32 %v58, %v103
  %v139 = vadd.f32 %v59, %v105
  %v140 = vadd.f32 %v60, %v107
  %v141 = vadd.f32 %v61, %v109
  %v142 = vmul.f32 %v126, 0.25
  %v143 = vmul.f32 %v127, 0.25
  %v144 = vmul.f32 %v128, 0.25
  %v145 = vmul.f32 %v129, 0.25
  %v146 = vmul.f32 %v130, 0.25
  %v147 = vmul.f32 %v131, 0.25
  %v148 = vmul.f32 %v132, 0.25
  %v149 = vmul.f32 %v133, 0.25
  %v150 = vmul.f32 %v134, 0.25
  %v151 = vmul.f32 %v135, 0.25
  %v152 = vmul.f32 %v136, 0.25
  %v153 = vmul.f32 %v137, 0.25
  %v154 = vmul.f32 %v138, 0.25
  %v155 = vmul.f32 %v139, 0.25
  %v156 = vmul.f32 %v140, 0.25
  %v157 = vmul.f32 %v141, 0.25
  %v166 = vrot.slane %v144, 7
  %vm167 = vcmask 1041409
  %v168 = vsel %vm167, %v166, %v142
  %v169 = vrot.slane %v146, 6
  %vm170 = vcmask 1042434
  %v171 = vsel %vm170, %v169, %v168
  %v172 = vrot.slane %v148, 5
  %vm173 = vcmask 1043459
  %v174 = vsel %vm173, %v172, %v171
  %v175 = vrot.slane %v150, 4
  %vm176 = vcmask 1044484
  %v177 = vsel %vm176, %v175, %v174
  %v178 = vrot.slane %v152, 3
  %vm179 = vcmask 1045509
  %v180 = vsel %vm179, %v178, %v177
  %v181 = vrot.slane %v154, 2
  %vm182 = vcmask 1046534
  %v183 = vsel %vm182, %v181, %v180
  %v184 = vrot.slane %v156, 1
  %vm185 = vcmask 1047559
  %v186 = vsel %vm185, %v184, %v183
  %vm188 = vcmask 64512
  %189 = vst.msk [vmem:[#allocation2] sm:$0xff] %vm188, %v186
  %v190 = vsel %vm170, %v166, %v142
  %v191 = vsel %vm173, %v169, %v190
  %v192 = vsel %vm176, %v172, %v191
  %v193 = vsel %vm179, %v175, %v192
  %v194 = vsel %vm182, %v178, %v193
  %v195 = vsel %vm185, %v181, %v194
  %196 = vrot.lane.b32.xlu0 %v195, 8
  %v197 = vpop.permute.xlu0 %196
  %198 = vrot.lane.b32.xlu0 %v184, 8
  %v199 = vpop.permute.xlu0 %198
  %vm202 = vcmask 130113
  %203 = vst.msk [vmem:[#allocation2 - $0x1] sm:$0xfe] %vm202, %v197
  %vm204 = vcmask 122944
  %205 = vst.msk [vmem:[#allocation2 + $0x7] sm:$0x1] %vm204, %v199
  %v206 = vsel %vm173, %v166, %v142
  %v207 = vsel %vm176, %v169, %v206
  %v208 = vsel %vm179, %v172, %v207
  %v209 = vsel %vm182, %v175, %v208
  %v210 = vsel %vm185, %v178, %v209
  %v211 = vsel %vm167, %v184, %v181
  %212 = vrot.lane.b32.xlu0 %v210, 16
  %v213 = vpop.permute.xlu0 %212
  %214 = vrot.lane.b32.xlu0 %v211, 16
  %v215 = vpop.permute.xlu0 %214
  %vm218 = vcmask 195714
  %219 = vst.msk [vmem:[#allocation2 - $0x2] sm:$0xfc] %vm218, %v213
  %vm220 = vcmask 189568
  %221 = vst.msk [vmem:[#allocation2 + $0x6] sm:$0x3] %vm220, %v215
  %v222 = vsel %vm176, %v166, %v142
  %v223 = vsel %vm179, %v169, %v222
  %v224 = vsel %vm182, %v172, %v223
  %v225 = vsel %vm185, %v175, %v224
  %v226 = vsel %vm167, %v181, %v178
  %v227 = vsel %vm170, %v184, %v226
  %228 = vrot.lane.b32.xlu0 %v225, 24
  %v229 = vpop.permute.xlu0 %228
  %230 = vrot.lane.b32.xlu0 %v227, 24
  %v231 = vpop.permute.xlu0 %230
  %vm234 = vcmask 261315
  %235 = vst.msk [vmem:[#allocation2 - $0x3] sm:$0xf8] %vm234, %v229
  %vm236 = vcmask 256192
  %237 = vst.msk [vmem:[#allocation2 + $0x5] sm:$0x7] %vm236, %v231
  %v238 = vsel %vm179, %v166, %v142
  %v239 = vsel %vm182, %v169, %v238
  %v240 = vsel %vm185, %v172, %v239
  %v241 = vsel %vm167, %v178, %v175
  %v242 = vsel %vm170, %v181, %v241
  %v243 = vsel %vm173, %v184, %v242
  %244 = vrot.lane.b32.xlu0 %v240, 32
  %v245 = vpop.permute.xlu0 %244
  %246 = vrot.lane.b32.xlu0 %v243, 32
  %v247 = vpop.permute.xlu0 %246
  %vm250 = vcmask 326916
  %251 = vst.msk [vmem:[#allocation2 - $0x4] sm:$0xf0] %vm250, %v245
  %vm252 = vcmask 322816
  %253 = vst.msk [vmem:[#allocation2 + $0x4] sm:$0xf] %vm252, %v247
  %v254 = vsel %vm182, %v166, %v142
  %v255 = vsel %vm185, %v169, %v254
  %v256 = vsel %vm167, %v175, %v172
  %v257 = vsel %vm170, %v178, %v256
  %v258 = vsel %vm173, %v181, %v257
  %v259 = vsel %vm176, %v184, %v258
  %260 = vrot.lane.b32.xlu0 %v255, 40
  %v261 = vpop.permute.xlu0 %260
  %262 = vrot.lane.b32.xlu0 %v259, 40
  %v263 = vpop.permute.xlu0 %262
  %vm266 = vcmask 392517
  %267 = vst.msk [vmem:[#allocation2 - $0x5] sm:$0xe0] %vm266, %v261
  %vm268 = vcmask 389440
  %269 = vst.msk [vmem:[#allocation2 + $0x3] sm:$0x1f] %vm268, %v263
  %v270 = vsel %vm185, %v166, %v142
  %v271 = vsel %vm167, %v172, %v169
  %v272 = vsel %vm170, %v175, %v271
  %v273 = vsel %vm173, %v178, %v272
  %v274 = vsel %vm176, %v181, %v273
  %v275 = vsel %vm179, %v184, %v274
  %276 = vrot.lane.b32.xlu0 %v270, 48
  %v277 = vpop.permute.xlu0 %276
  %278 = vrot.lane.b32.xlu0 %v275, 48
  %v279 = vpop.permute.xlu0 %278
  %vm282 = vcmask 458118
  %283 = vst.msk [vmem:[#allocation2 - $0x6] sm:$0xc0] %vm282, %v277
  %vm284 = vcmask 456064
  %285 = vst.msk [vmem:[#allocation2 + $0x2] sm:$0x3f] %vm284, %v279
  %v286 = vsel %vm167, %v169, %v166
  %v287 = vsel %vm170, %v172, %v286
  %v288 = vsel %vm173, %v175, %v287
  %v289 = vsel %vm176, %v178, %v288
  %v290 = vsel %vm179, %v181, %v289
  %v291 = vsel %vm182, %v184, %v290
  %292 = vrot.lane.b32.xlu0 %v142, 56
  %v293 = vpop.permute.xlu0 %292
  %294 = vrot.lane.b32.xlu0 %v291, 56
  %v295 = vpop.permute.xlu0 %294
  %vm298 = vcmask 523719
  %299 = vst.msk [vmem:[#allocation2 - $0x7] sm:$0x80] %vm298, %v293
  %vm300 = vcmask 522688
  %301 = vst.msk [vmem:[#allocation2 + $0x1] sm:$0x7f] %vm300, %v295
  %v310 = vrot.slane %v145, 7
  %v311 = vsel %vm167, %v310, %v143
  %v312 = vrot.slane %v147, 6
  %v313 = vsel %vm170, %v312, %v311
  %v314 = vrot.slane %v149, 5
  %v315 = vsel %vm173, %v314, %v313
  %v316 = vrot.slane %v151, 4
  %v317 = vsel %vm176, %v316, %v315
  %v318 = vrot.slane %v153, 3
  %v319 = vsel %vm179, %v318, %v317
  %v320 = vrot.slane %v155, 2
  %v321 = vsel %vm182, %v320, %v319
  %v322 = vrot.slane %v157, 1
  %v323 = vsel %vm185, %v322, %v321
  %324 = vrot.lane.b32.xlu0 %v323, 64
  %v325 = vpop.permute.xlu0 %324
  %vm327 = vcmask 589312
  %328 = vst.msk [vmem:[#allocation2] sm:$0xff] %vm327, %v325
  %v329 = vsel %vm170, %v310, %v143
  %v330 = vsel %vm173, %v312, %v329
  %v331 = vsel %vm176, %v314, %v330
  %v332 = vsel %vm179, %v316, %v331
  %v333 = vsel %vm182, %v318, %v332
  %v334 = vsel %vm185, %v320, %v333
  %335 = vrot.lane.b32.xlu0 %v334, 72
  %v336 = vpop.permute.xlu0 %335
  %337 = vrot.lane.b32.xlu0 %v322, 72
  %v338 = vpop.permute.xlu0 %337
  %vm341 = vcmask 654913
  %342 = vst.msk [vmem:[#allocation2 - $0x1] sm:$0xfe] %vm341, %v336
  %vm343 = vcmask 647744
  %344 = vst.msk [vmem:[#allocation2 + $0x7] sm:$0x1] %vm343, %v338
  %v345 = vsel %vm173, %v310, %v143
  %v346 = vsel %vm176, %v312, %v345
  %v347 = vsel %vm179, %v314, %v346
  %v348 = vsel %vm182, %v316, %v347
  %v349 = vsel %vm185, %v318, %v348
  %v350 = vsel %vm167, %v322, %v320
  %351 = vrot.lane.b32.xlu0 %v349, 80
  %v352 = vpop.permute.xlu0 %351
  %353 = vrot.lane.b32.xlu0 %v350, 80
  %v354 = vpop.permute.xlu0 %353
  %vm357 = vcmask 720514
  %358 = vst.msk [vmem:[#allocation2 - $0x2] sm:$0xfc] %vm357, %v352
  %vm359 = vcmask 714368
  %360 = vst.msk [vmem:[#allocation2 + $0x6] sm:$0x3] %vm359, %v354
  %v361 = vsel %vm176, %v310, %v143
  %v362 = vsel %vm179, %v312, %v361
  %v363 = vsel %vm182, %v314, %v362
  %v364 = vsel %vm185, %v316, %v363
  %v365 = vsel %vm167, %v320, %v318
  %v366 = vsel %vm170, %v322, %v365
  %367 = vrot.lane.b32.xlu0 %v364, 88
  %v368 = vpop.permute.xlu0 %367
  %369 = vrot.lane.b32.xlu0 %v366, 88
  %v370 = vpop.permute.xlu0 %369
  %vm373 = vcmask 786115
  %374 = vst.msk [vmem:[#allocation2 - $0x3] sm:$0xf8] %vm373, %v368
  %vm375 = vcmask 780992
  %376 = vst.msk [vmem:[#allocation2 + $0x5] sm:$0x7] %vm375, %v370
  %v377 = vsel %vm179, %v310, %v143
  %v378 = vsel %vm182, %v312, %v377
  %v379 = vsel %vm185, %v314, %v378
  %v380 = vsel %vm167, %v318, %v316
  %v381 = vsel %vm170, %v320, %v380
  %v382 = vsel %vm173, %v322, %v381
  %383 = vrot.lane.b32.xlu0 %v379, 96
  %v384 = vpop.permute.xlu0 %383
  %385 = vrot.lane.b32.xlu0 %v382, 96
  %v386 = vpop.permute.xlu0 %385
  %vm389 = vcmask 851716
  %390 = vst.msk [vmem:[#allocation2 - $0x4] sm:$0xf0] %vm389, %v384
  %vm391 = vcmask 847616
  %392 = vst.msk [vmem:[#allocation2 + $0x4] sm:$0xf] %vm391, %v386
  %v393 = vsel %vm182, %v310, %v143
  %v394 = vsel %vm185, %v312, %v393
  %v395 = vsel %vm167, %v316, %v314
  %v396 = vsel %vm170, %v318, %v395
  %v397 = vsel %vm173, %v320, %v396
  %v398 = vsel %vm176, %v322, %v397
  %399 = vrot.lane.b32.xlu0 %v394, 104
  %v400 = vpop.permute.xlu0 %399
  %401 = vrot.lane.b32.xlu0 %v398, 104
  %v402 = vpop.permute.xlu0 %401
  %vm405 = vcmask 917317
  %406 = vst.msk [vmem:[#allocation2 - $0x5] sm:$0xe0] %vm405, %v400
  %vm407 = vcmask 914240
  %408 = vst.msk [vmem:[#allocation2 + $0x3] sm:$0x1f] %vm407, %v402
  %v409 = vsel %vm185, %v310, %v143
  %v410 = vsel %vm167, %v314, %v312
  %v411 = vsel %vm170, %v316, %v410
  %v412 = vsel %vm173, %v318, %v411
  %v413 = vsel %vm176, %v320, %v412
  %v414 = vsel %vm179, %v322, %v413
  %415 = vrot.lane.b32.xlu0 %v409, 112
  %v416 = vpop.permute.xlu0 %415
  %417 = vrot.lane.b32.xlu0 %v414, 112
  %v418 = vpop.permute.xlu0 %417
  %vm421 = vcmask 982918
  %422 = vst.msk [vmem:[#allocation2 - $0x6] sm:$0xc0] %vm421, %v416
  %vm423 = vcmask 980864
  %424 = vst.msk [vmem:[#allocation2 + $0x2] sm:$0x3f] %vm423, %v418
  %v425 = vsel %vm167, %v312, %v310
  %v426 = vsel %vm170, %v314, %v425
  %v427 = vsel %vm173, %v316, %v426
  %v428 = vsel %vm176, %v318, %v427
  %v429 = vsel %vm179, %v320, %v428
  %v430 = vsel %vm182, %v322, %v429
  %431 = vrot.lane.b32.xlu0 %v143, 120
  %v432 = vpop.permute.xlu0 %431
  %433 = vrot.lane.b32.xlu0 %v430, 120
  %v434 = vpop.permute.xlu0 %433
  %vm437 = vcmask 1048519
  %438 = vst.msk [vmem:[#allocation2 - $0x7] sm:$0x80] %vm437, %v432
  %vm439 = vcmask 1047488
  %440 = vst.msk [vmem:[#allocation2 + $0x1] sm:$0x7f] %vm439, %v434
  %v441 = vld [vmem:[#allocation2] sm:$0xff]
  %v442 = vpack.c.bf16 %v441, %v441
  %v443 = vld [vmem:[%s1] sm:$0xf]
  %v444 = vld [vmem:[%s1 + $0x4] sm:$0xf]
  %v445 = vld [vmem:[%s1 + $0x8] sm:$0xf]
  %v446 = vld [vmem:[%s1 + $0xc] sm:$0xf]
  %v447 = vld [vmem:[%s1 + $0x10] sm:$0xf]
  %v448 = vld [vmem:[%s1 + $0x14] sm:$0xf]
  %v449 = vld [vmem:[%s1 + $0x18] sm:$0xf]
  %v450 = vld [vmem:[%s1 + $0x1c] sm:$0xf]
  %v451 = vld [vmem:[%s1 + $0x20] sm:$0xf]
  %v452 = vld [vmem:[%s1 + $0x24] sm:$0xf]
  %v453 = vld [vmem:[%s1 + $0x28] sm:$0xf]
  %v454 = vld [vmem:[%s1 + $0x2c] sm:$0xf]
  %v455 = vld [vmem:[%s1 + $0x30] sm:$0xf]
  %v456 = vld [vmem:[%s1 + $0x34] sm:$0xf]
  %v457 = vld [vmem:[%s1 + $0x38] sm:$0xf]
  %v458 = vld [vmem:[%s1 + $0x3c] sm:$0xf]
  %v459 = vld [vmem:[%s2] sm:$0x1]
  %v461 = vperm.slane %v459, 0
  %v479 = vunpack.c.l.b16 %v443
  %v480 = vunpack.c.l.b16 %v444
  %v481 = vunpack.c.l.b16 %v445
  %v482 = vunpack.c.l.b16 %v446
  %v483 = vunpack.c.l.b16 %v447
  %v484 = vunpack.c.l.b16 %v448
  %v485 = vunpack.c.l.b16 %v449
  %v486 = vunpack.c.l.b16 %v450
  %v487 = vunpack.c.l.b16 %v451
  %v488 = vunpack.c.l.b16 %v452
  %v489 = vunpack.c.l.b16 %v453
  %v490 = vunpack.c.l.b16 %v454
  %v491 = vunpack.c.l.b16 %v455
  %v492 = vunpack.c.l.b16 %v456
  %v493 = vunpack.c.l.b16 %v457
  %v494 = vunpack.c.l.b16 %v458
  %v495 = vpack.c.b16 %v480, %v479
  %v496 = vpack.c.b16 %v482, %v481
  %v497 = vpack.c.b16 %v484, %v483
  %v498 = vpack.c.b16 %v486, %v485
  %v499 = vpack.c.b16 %v488, %v487
  %v500 = vpack.c.b16 %v490, %v489
  %v501 = vpack.c.b16 %v492, %v491
  %v502 = vpack.c.b16 %v494, %v493
  %511 = vmatpush.bf16.msra.mxu0 %v502
  %512 = vmatpush.bf16.msra.mxu0 %v501
  %513 = vmatpush.bf16.msra.mxu0 %v500
  %514 = vmatpush.bf16.msra.mxu0 %v499
  %515 = vmatpush.bf16.msra.mxu0 %v498
  %516 = vmatpush.bf16.msra.mxu0 %v497
  %517 = vmatpush.bf16.msra.mxu0 %v496
  %518 = vmatpush.bf16.msra.mxu0 %v495
  %519 = vmatmul.bf16.gmra.mxu0 %v442
  %v520 = vpop.f32.mrf.mxu0
  %v521 = vadd.f32 %v461, %v520
  %v522 = vpop.f32.mrf.mxu0
  %523 = vdwg.mxu0
  %524 = vst [vmem:[%s3] sm:$0xff] %v521
  // Predicated region
  $region14: #{encoder_forward.1} parent=0 // pred_check
    _
  $region15: #{encoder_forward.1} parent=0 // pred_check_branch
    %526 = sbr.rel (0) target = $region17
  $region16: #{encoder_forward.1} parent=0 // pred_region
    _
  $region17: #{encoder_forward.1} parent=0 // pred_fallthru
    _
  // Predicated region
  $region18: #{encoder_forward.1} parent=0 // pred_check
    _
  $region19: #{encoder_forward.1} parent=0 // pred_check_branch
    %528 = sbr.rel (0) target = $region21
  $region20: #{encoder_forward.1} parent=0 // pred_region
    _
  $region21: #{encoder_forward.1} parent=0 // pred_fallthru
    _

</llo_original>
